<compile_context>
chip_gen: v5e
topology: v5e:2x2
jax: 0.10.0
libtpu: 0.0.40
codegen_flags: <defaults>
</compile_context>

<pallas_src>
import functools

import jax
import jax.numpy as jnp
from jax.experimental import pallas as pl
from jax.experimental.pallas import tpu as pltpu


def _round_up(x: int, m: int) -> int:
    return (x + m - 1) // m * m


def _pick_tk(Kp: int, Mp: int, itemsize: int, max_block_bytes: int) -> int:
    """Largest multiple of 128 that divides Kp (so every K block is full) while
    keeping one streamed (Mp, tk) feature block <= max_block_bytes (>=128)."""
    q = Kp // 128
    cap = max(1, max_block_bytes // (itemsize * Mp * 128))
    best = 1
    d = 1
    while d * d <= q:
        if q % d == 0:
            for c in (d, q // d):
                if c <= cap and c > best:
                    best = c
        d += 1
    return 128 * best


def _gram_kernel(feat_ref, g_ref, *, inv_gram):
    """Gram only (target construction): accumulate F @ F.T into the resident
    output block; scale once at the end.  No scratch, no dead MSE."""
    k = pl.program_id(0)

    @pl.when(k == 0)
    def _init():
        g_ref[...] = jnp.zeros_like(g_ref)

    f = feat_ref[...]                                    # (Mp, tk)
    g_ref[...] += jax.lax.dot_general(                   # NT matmul on the MXU
        f, f, (((1,), (1,)), ((), ())), preferred_element_type=jnp.float32)

    @pl.when(k == pl.num_programs(0) - 1)
    def _finalize():
        g_ref[...] = g_ref[...] * inv_gram


def _gram_mse_kernel(feat_ref, tgt_ref, g_ref, loss_ref, *, inv_gram, inv_mse):
    """Forward: same accumulation, plus the MSE against the target Gram fused
    into the final reduction step (no extra HBM round trip for G)."""
    k = pl.program_id(0)

    @pl.when(k == 0)
    def _init():
        g_ref[...] = jnp.zeros_like(g_ref)

    f = feat_ref[...]                                    # (Mp, tk)
    g_ref[...] += jax.lax.dot_general(
        f, f, (((1,), (1,)), ((), ())), preferred_element_type=jnp.float32)

    @pl.when(k == pl.num_programs(0) - 1)
    def _finalize():
        g = g_ref[...] * inv_gram                        # normalized Gram, f32
        g_ref[...] = g
        diff = g - tgt_ref[...]
        sq = diff * diff
        # mean over the true (M, M) Gram; zero-padded rows/cols contribute 0.
        row = jnp.sum(sq, axis=1, keepdims=True)         # lane reduce (Mp, 1)
        loss_ref[...] = jnp.sum(row, axis=0, keepdims=True) * inv_mse  # (1, 1)


def _gram_pallas(x, target_gram=None, *, max_block_bytes=2 * 1024 * 1024):
    """Gram matrix of x (NCHW) and, if target_gram is given, the fused MSE.

    Returns G (M, M) f32, or (G, mse_loss) when target_gram is not None.
    max_block_bytes sizes the streamed feature block (2 MiB fits every TPU
    generation's scoped VMEM; can be raised to 4-6 MiB on v6e).
    """
    N, C, H, W = x.shape
    M, K = N * C, H * W
    Mp, Kp = _round_up(M, 128), _round_up(K, 128)
    itemsize = jnp.dtype(x.dtype).itemsize
    tk = _pick_tk(Kp, Mp, itemsize, max_block_bytes)
    nk = Kp // tk
    with_mse = target_gram is not None

    feat = x.reshape(M, K)                               # free view of NCHW
    if (Mp, Kp) != (M, K):
        # Alignment pad only (<=127 per axis, zeros -> Gram/MSE unchanged).
        # The common aligned case above takes the zero-copy path.
        feat = jnp.pad(feat, ((0, Mp - M), (0, Kp - K)))

    inv_gram = 1.0 / float(N * C * H * W)                # PyTorch: G.div(a*b*c*d)
    inv_mse = 1.0 / float(M * M)                         # mse_loss 'mean'

    feat_spec = pl.BlockSpec((Mp, tk), lambda k: (0, k))     # streamed K chunks
    gram_spec = pl.BlockSpec((Mp, Mp), lambda k: (0, 0))     # VMEM-resident acc

    # VMEM budget: double-buffered streamed feature block + resident Gram
    # (+ resident target & scalar-loss tile in forward), plus headroom.
    vmem_bytes = 2 * Mp * tk * itemsize + 2 * Mp * Mp * 4
    if with_mse:
        vmem_bytes += 2 * Mp * Mp * 4 + 2 * 8 * 128 * 4
    vmem_limit = int(max(vmem_bytes + (2 << 20), 32 << 20))

    compiler_params = pltpu.CompilerParams(
        dimension_semantics=("arbitrary",),              # K axis is a reduction
        vmem_limit_bytes=vmem_limit,
    )
    cost = pl.CostEstimate(
        flops=2 * Mp * Mp * Kp,
        transcendentals=0,
        bytes_accessed=Mp * Kp * itemsize + Mp * Mp * 4 * (2 if with_mse else 1),
    )

    if not with_mse:
        kernel = functools.partial(_gram_kernel, inv_gram=inv_gram)
        g_pad = pl.pallas_call(
            kernel,
            out_shape=jax.ShapeDtypeStruct((Mp, Mp), jnp.float32),
            grid_spec=pltpu.PrefetchScalarGridSpec(
                num_scalar_prefetch=0,
                grid=(nk,),
                in_specs=[feat_spec],
                out_specs=gram_spec,
            ),
            compiler_params=compiler_params,
            cost_estimate=cost,
        )(feat)
        return g_pad[:M, :M]

    tgt = target_gram.astype(jnp.float32)
    if Mp != M:
        tgt = jnp.pad(tgt, ((0, Mp - M), (0, Mp - M)))   # zeros match padded G

    kernel = functools.partial(_gram_mse_kernel, inv_gram=inv_gram, inv_mse=inv_mse)
    g_pad, loss = pl.pallas_call(
        kernel,
        out_shape=(
            jax.ShapeDtypeStruct((Mp, Mp), jnp.float32),
            jax.ShapeDtypeStruct((1, 1), jnp.float32),
        ),
        grid_spec=pltpu.PrefetchScalarGridSpec(
            num_scalar_prefetch=0,
            grid=(nk,),
            in_specs=[
                feat_spec,                                # streamed feature chunk
                pl.BlockSpec((Mp, Mp), lambda k: (0, 0)),  # resident target Gram
            ],
            out_specs=(
                gram_spec,                                # resident Gram output
                pl.BlockSpec((1, 1), lambda k: (0, 0)),   # scalar loss
            ),
        ),
        compiler_params=compiler_params,
        cost_estimate=cost,
    )(feat, tgt)
    return g_pad[:M, :M], loss[0, 0]


def gram_matrix(x):
    """Pallas equivalent of NST.gram_matrix (normalized F @ F.T)."""
    return _gram_pallas(x)


def _gram_and_mse(x, target_gram):
    """Gram of x plus fused mse_loss(G, target_gram), one pallas_call."""
    return _gram_pallas(x, target_gram)


class StyleLoss:
    """JAX/Pallas port of the PyTorch StyleLoss module (pass-through + loss)."""

    def __init__(self, target_feature):
        # "detached" by construction; no dead MSE work during target build.
        self.target = gram_matrix(target_feature)
        self.loss = None

    def __call__(self, x):
        _, self.loss = _gram_and_mse(x, self.target)
        return x                                          # forward returns input


if __name__ == "__main__":
    key = jax.random.PRNGKey(0)
    k_tgt, k_in = jax.random.split(key)

    # Small NCHW feature maps, as produced by a conv layer in NST.
    N, C, H, W = 2, 4, 16, 16
    target_feature = jax.random.uniform(k_tgt, (N, C, H, W), dtype=jnp.float32)
    x = jax.random.uniform(k_in, (N, C, H, W), dtype=jnp.float32)

    module = StyleLoss(target_feature)
    out = module(x)
    out = jax.block_until_ready(out)
    loss = jax.block_until_ready(module.loss)

    # --- reference (plain JAX, mirrors the PyTorch code) ---
    def ref_gram(t):
        a, b, c, d = t.shape
        f = t.reshape(a * b, c * d)
        return (f @ f.T) / (a * b * c * d)

    g_ref = ref_gram(x)
    t_ref = ref_gram(target_feature)
    loss_ref = jnp.mean((g_ref - t_ref) ** 2)

    g_kernel, _ = _gram_and_mse(x, module.target)

    assert out.shape == x.shape
    assert jnp.array_equal(out, x)                        # forward is a pass-through
    # Gram matrices: tolerance covers MXU f32 matmul pass precision.
    assert jnp.allclose(module.target, t_ref, atol=2e-3, rtol=1e-2)
    assert jnp.allclose(g_kernel, g_ref, atol=2e-3, rtol=1e-2)
    # Fused in-kernel MSE must match an MSE computed from the kernel's own Grams.
    loss_from_kernel_g = jnp.mean((g_kernel - module.target) ** 2)
    assert jnp.allclose(loss, loss_from_kernel_g, atol=1e-9, rtol=1e-4)
    # And agree with the full plain-JAX reference up to matmul precision.
    assert jnp.allclose(loss, loss_ref, atol=1e-7, rtol=2e-1)

    print("KERNEL_OK")
</pallas_src>

<mosaic_0001>
module attributes {stable_mosaic.version = 11 : i64} {
  func.func @_gram_kernel(%arg0: i32, %arg1: memref<128x256xf32, #tpu.memory_space<vmem>>, %arg2: memref<128x128xf32, #tpu.memory_space<vmem>>) attributes {dimension_semantics = [#tpu.dimension_semantics<arbitrary>], iteration_bounds = array<i64: 1>, scalar_prefetch = 0 : i64, scratch_operands = 0 : i64, tpu.core_type = #tpu.core_type<tc>, window_params = [{transform_indices = @transform_0, window_bounds = array<i64: 128, 256>}, {pipeline_mode = #tpu.pipeline_mode<synchronous>, transform_indices = @transform_1, window_bounds = array<i64: 128, 128>}]} {
    %c0_i32 = arith.constant 0 : i32
    %0 = arith.cmpi eq, %arg0, %c0_i32 : i32
    %1 = arith.extui %0 : i1 to i32
    %c0_i32_0 = arith.constant 0 : i32
    %2 = arith.cmpi ne, %1, %c0_i32_0 : i32
    scf.if %2 {
      %cst_8 = arith.constant 0.000000e+00 : f32
      %11 = vector.broadcast %cst_8 : f32 to vector<128x128xf32>
      %c0_9 = arith.constant 0 : index
      %c0_10 = arith.constant 0 : index
      %12 = vector.load %arg2[%c0_9, %c0_10] : memref<128x128xf32, #tpu.memory_space<vmem>>, vector<128x128xf32>
      tpu.vector_store %arg2[%c0_9, %c0_10], %11 {strides = array<i32>} : memref<128x128xf32, #tpu.memory_space<vmem>>, vector<128x128xf32>,
    } else {
    }
    %c0 = arith.constant 0 : index
    %c0_1 = arith.constant 0 : index
    %3 = vector.load %arg1[%c0, %c0_1] : memref<128x256xf32, #tpu.memory_space<vmem>>, vector<128x256xf32>
    %c0_2 = arith.constant 0 : index
    %c0_3 = arith.constant 0 : index
    %4 = vector.load %arg2[%c0_2, %c0_3] : memref<128x128xf32, #tpu.memory_space<vmem>>, vector<128x128xf32>
    %cst = arith.constant dense<0.000000e+00> : vector<128x128xf32>
    %5 = tpu.matmul %3, %3, %cst {dimension_numbers = #tpu.dot_dimension_numbers<[1], [1], [0], [0], [0, 0, 1, 0], [], []>} : vector<128x256xf32>, vector<128x256xf32>, vector<128x128xf32> -> vector<128x128xf32>
    %6 = arith.addf %4, %5 : vector<128x128xf32>
    %c0_4 = arith.constant 0 : index
    %c0_5 = arith.constant 0 : index
    %7 = vector.load %arg2[%c0_4, %c0_5] : memref<128x128xf32, #tpu.memory_space<vmem>>, vector<128x128xf32>
    tpu.vector_store %arg2[%c0_4, %c0_5], %6 {strides = array<i32>} : memref<128x128xf32, #tpu.memory_space<vmem>>, vector<128x128xf32>,
    %c0_i32_6 = arith.constant 0 : i32
    %8 = arith.cmpi eq, %arg0, %c0_i32_6 : i32
    %9 = arith.extui %8 : i1 to i32
    %c0_i32_7 = arith.constant 0 : i32
    %10 = arith.cmpi ne, %9, %c0_i32_7 : i32
    scf.if %10 {
      %c0_8 = arith.constant 0 : index
      %c0_9 = arith.constant 0 : index
      %11 = vector.load %arg2[%c0_8, %c0_9] : memref<128x128xf32, #tpu.memory_space<vmem>>, vector<128x128xf32>
      %cst_10 = arith.constant 4.8828125E-4 : f32
      %12 = vector.broadcast %cst_10 : f32 to vector<128x128xf32>
      %13 = arith.mulf %11, %12 : vector<128x128xf32>
      %c0_11 = arith.constant 0 : index
      %c0_12 = arith.constant 0 : index
      %14 = vector.load %arg2[%c0_11, %c0_12] : memref<128x128xf32, #tpu.memory_space<vmem>>, vector<128x128xf32>
      tpu.vector_store %arg2[%c0_11, %c0_12], %13 {strides = array<i32>} : memref<128x128xf32, #tpu.memory_space<vmem>>, vector<128x128xf32>,
    } else {
    }
    return
  }
  func.func @transform_0(%arg0: i32) -> (i32, i32) {
    %c0_i32 = arith.constant 0 : i32
    %c0_i32_0 = arith.constant 0 : i32
    return %c0_i32, %arg0 : i32, i32
  }
  func.func @transform_1(%arg0: i32) -> (i32, i32) {
    %c0_i32 = arith.constant 0 : i32
    %c0_i32_0 = arith.constant 0 : i32
    %c0_i32_1 = arith.constant 0 : i32
    return %c0_i32, %c0_i32_0 : i32, i32
  }
}

</mosaic_0001>

<llo_original>
// kernel: tpu_custom_call.1
$region0: #{tpu_custom_call.1}
  #allocation0 [shape = 'u32[]', space=smem, size = 0x4, offset = 0x4, fixed_abs, tag = 'smem constant byte address 0x4 - core index']
  #allocation1 [shape = 'u32[72,128]{1,0:T(1,128)}', space=vmem, size = 0x9000, scoped, tag = 'internal scratch']
  %s0 = inlined_call_operand.hbm [shape: f32[128,256], index: 0, kind: input, shape index: {}]
  %s1 = inlined_call_operand.hbm [shape: f32[128,128], index: 1, kind: output, shape index: {}]
  %s2 = sld [smem:[#allocation0]]
  $region26: #{tpu_custom_call.1} parent=0
    _
  %s4 = ssub.s32 1, %s2
  %s5 = scalar_select 0, %s4, %s2
  $region1: #{tpu_custom_call.1} parent=0
    #allocation2 [shape = 'u8[131072]{0}', space=vmem, size = 0x20000, scoped, tag = 'input window, operand 0, single buffered']
    #allocation3 [shape = 's32[1]{0}', space=sflag, size = 0x4, scoped, tag = 'scoped memory for tpu_custom_call.1']
    #allocation4 [shape = 's32[1]{0}', space=sflag, size = 0x4, scoped, tag = 'scoped memory for tpu_custom_call.1']
    #allocation5 [shape = 'u8[65536]{0}', space=vmem, size = 0x10000, scoped, tag = 'output window, operand 0, single buffered']
    %6 = vsyncpa [#allocation3], 0
    %7 = vsyncpa [#allocation4], 0
    // Predicated region
    $region2: #{tpu_custom_call.1} parent=1 // pred_check
      _
    $region3: #{tpu_custom_call.1} parent=1 // pred_check_branch
      %9 = sbr.rel (0) target = $region5
    $region4: #{tpu_custom_call.1} parent=1 // pred_region
      %11 = vsyncadd [#allocation3], 0
      %s12 = sshll.u32 %s0, 4
      %s13 = int_to_ptr.hbm [resolvable:$true] %s12
      %s14 = sshll.u32 [#allocation2], 4
      %s15 = int_to_ptr.vmem [resolvable:$true] %s14
      %20 = dma.hbm_to_vmem [thread:$0]  %s13, 4096, %s15, [#allocation3], 256, 256, 16
    $region5: #{tpu_custom_call.1} parent=1 // pred_fallthru
      _
    // Predicated region
    $region6: #{tpu_custom_call.1} parent=1 // pred_check
      _
    $region7: #{tpu_custom_call.1} parent=1 // pred_check_branch
      %22 = sbr.rel (0) target = $region9
    $region8: #{tpu_custom_call.1} parent=1 // pred_region
      %24 = dma.done [#allocation3], 4096
    $region9: #{tpu_custom_call.1} parent=1 // pred_fallthru
      _
    %p25 = scmp.eq.s32.totalorder 0, 0
    // Predicated region
    $region10: #{tpu_custom_call.1} parent=1 // pred_check
      %p26 = pneg %p25
    $region11: #{tpu_custom_call.1} parent=1 // pred_check_branch
      %28 = sbr.rel (%p26) target = $region13
    $region12: #{tpu_custom_call.1} parent=1 // pred_region
      %29 = vst [vmem:[#allocation5] sm:$0xff] 0.0
      %30 = vst [vmem:[#allocation5 + $0x8] sm:$0xff] 0.0
      %31 = vst [vmem:[#allocation5 + $0x10] sm:$0xff] 0.0
      %32 = vst [vmem:[#allocation5 + $0x18] sm:$0xff] 0.0
      %33 = vst [vmem:[#allocation5 + $0x20] sm:$0xff] 0.0
      %34 = vst [vmem:[#allocation5 + $0x28] sm:$0xff] 0.0
      %35 = vst [vmem:[#allocation5 + $0x30] sm:$0xff] 0.0
      %36 = vst [vmem:[#allocation5 + $0x38] sm:$0xff] 0.0
      %37 = vst [vmem:[#allocation5 + $0x40] sm:$0xff] 0.0
      %38 = vst [vmem:[#allocation5 + $0x48] sm:$0xff] 0.0
      %39 = vst [vmem:[#allocation5 + $0x50] sm:$0xff] 0.0
      %40 = vst [vmem:[#allocation5 + $0x58] sm:$0xff] 0.0
      %41 = vst [vmem:[#allocation5 + $0x60] sm:$0xff] 0.0
      %42 = vst [vmem:[#allocation5 + $0x68] sm:$0xff] 0.0
      %43 = vst [vmem:[#allocation5 + $0x70] sm:$0xff] 0.0
      %44 = vst [vmem:[#allocation5 + $0x78] sm:$0xff] 0.0
    $region13: #{tpu_custom_call.1} parent=1 // pred_fallthru
      _
    %v45 = vld [vmem:[#allocation2] sm:$0xff]
    %v46 = vld [vmem:[#allocation2 + $0x8] sm:$0xff]
    %v47 = vld [vmem:[#allocation2 + $0x10] sm:$0xff]
    %v48 = vld [vmem:[#allocation2 + $0x18] sm:$0xff]
    %v49 = vld [vmem:[#allocation2 + $0x20] sm:$0xff]
    %v50 = vld [vmem:[#allocation2 + $0x28] sm:$0xff]
    %v51 = vld [vmem:[#allocation2 + $0x30] sm:$0xff]
    %v52 = vld [vmem:[#allocation2 + $0x38] sm:$0xff]
    %v53 = vld [vmem:[#allocation2 + $0x40] sm:$0xff]
    %v54 = vld [vmem:[#allocation2 + $0x48] sm:$0xff]
    %v55 = vld [vmem:[#allocation2 + $0x50] sm:$0xff]
    %v56 = vld [vmem:[#allocation2 + $0x58] sm:$0xff]
    %v57 = vld [vmem:[#allocation2 + $0x60] sm:$0xff]
    %v58 = vld [vmem:[#allocation2 + $0x68] sm:$0xff]
    %v59 = vld [vmem:[#allocation2 + $0x70] sm:$0xff]
    %v60 = vld [vmem:[#allocation2 + $0x78] sm:$0xff]
    %v61 = vld [vmem:[#allocation2 + $0x80] sm:$0xff]
    %v62 = vld [vmem:[#allocation2 + $0x88] sm:$0xff]
    %v63 = vld [vmem:[#allocation2 + $0x90] sm:$0xff]
    %v64 = vld [vmem:[#allocation2 + $0x98] sm:$0xff]
    %v65 = vld [vmem:[#allocation2 + $0xa0] sm:$0xff]
    %v66 = vld [vmem:[#allocation2 + $0xa8] sm:$0xff]
    %v67 = vld [vmem:[#allocation2 + $0xb0] sm:$0xff]
    %v68 = vld [vmem:[#allocation2 + $0xb8] sm:$0xff]
    %v69 = vld [vmem:[#allocation2 + $0xc0] sm:$0xff]
    %v70 = vld [vmem:[#allocation2 + $0xc8] sm:$0xff]
    %v71 = vld [vmem:[#allocation2 + $0xd0] sm:$0xff]
    %v72 = vld [vmem:[#allocation2 + $0xd8] sm:$0xff]
    %v73 = vld [vmem:[#allocation2 + $0xe0] sm:$0xff]
    %v74 = vld [vmem:[#allocation2 + $0xe8] sm:$0xff]
    %v75 = vld [vmem:[#allocation2 + $0xf0] sm:$0xff]
    %v76 = vld [vmem:[#allocation2 + $0xf8] sm:$0xff]
    %v77 = vld [vmem:[#allocation5] sm:$0xff]
    %v78 = vld [vmem:[#allocation5 + $0x8] sm:$0xff]
    %v79 = vld [vmem:[#allocation5 + $0x10] sm:$0xff]
    %v80 = vld [vmem:[#allocation5 + $0x18] sm:$0xff]
    %v81 = vld [vmem:[#allocation5 + $0x20] sm:$0xff]
    %v82 = vld [vmem:[#allocation5 + $0x28] sm:$0xff]
    %v83 = vld [vmem:[#allocation5 + $0x30] sm:$0xff]
    %v84 = vld [vmem:[#allocation5 + $0x38] sm:$0xff]
    %v85 = vld [vmem:[#allocation5 + $0x40] sm:$0xff]
    %v86 = vld [vmem:[#allocation5 + $0x48] sm:$0xff]
    %v87 = vld [vmem:[#allocation5 + $0x50] sm:$0xff]
    %v88 = vld [vmem:[#allocation5 + $0x58] sm:$0xff]
    %v89 = vld [vmem:[#allocation5 + $0x60] sm:$0xff]
    %v90 = vld [vmem:[#allocation5 + $0x68] sm:$0xff]
    %v91 = vld [vmem:[#allocation5 + $0x70] sm:$0xff]
    %v92 = vld [vmem:[#allocation5 + $0x78] sm:$0xff]
    %93 = vmatpush.xpose.msra.mxu0 %v75
    %94 = vmatpush.xpose.msra.mxu0 %v73
    %95 = vmatpush.xpose.msra.mxu0 %v71
    %96 = vmatpush.xpose.msra.mxu0 %v69
    %97 = vmatpush.xpose.msra.mxu0 %v67
    %98 = vmatpush.xpose.msra.mxu0 %v65
    %99 = vmatpush.xpose.msra.mxu0 %v63
    %100 = vmatpush.xpose.msra.mxu0 %v61
    %101 = vmatpush.xpose.msra.mxu0 %v59
    %102 = vmatpush.xpose.msra.mxu0 %v57
    %103 = vmatpush.xpose.msra.mxu0 %v55
    %104 = vmatpush.xpose.msra.mxu0 %v53
    %105 = vmatpush.xpose.msra.mxu0 %v51
    %106 = vmatpush.xpose.msra.mxu0 %v49
    %107 = vmatpush.xpose.msra.mxu0 %v47
    %108 = vmatpush.xpose.msra.mxu0 %v45
    %109 = vmatmul.f32.gmra.mxu0 %v45
    %v110 = vpop.f32.mrf.mxu0
    %v111 = vadd.f32 0.0, %v110
    %112 = vmatmul.f32.gmra.mxu0 %v47
    %v113 = vpop.f32.mrf.mxu0
    %v114 = vadd.f32 0.0, %v113
    %115 = vmatmul.f32.gmra.mxu0 %v49
    %v116 = vpop.f32.mrf.mxu0
    %v117 = vadd.f32 0.0, %v116
    %118 = vmatmul.f32.gmra.mxu0 %v51
    %v119 = vpop.f32.mrf.mxu0
    %v120 = vadd.f32 0.0, %v119
    %121 = vmatmul.f32.gmra.mxu0 %v53
    %v122 = vpop.f32.mrf.mxu0
    %v123 = vadd.f32 0.0, %v122
    %124 = vmatmul.f32.gmra.mxu0 %v55
    %v125 = vpop.f32.mrf.mxu0
    %v126 = vadd.f32 0.0, %v125
    %127 = vmatmul.f32.gmra.mxu0 %v57
    %v128 = vpop.f32.mrf.mxu0
    %v129 = vadd.f32 0.0, %v128
    %130 = vmatmul.f32.gmra.mxu0 %v59
    %v131 = vpop.f32.mrf.mxu0
    %v132 = vadd.f32 0.0, %v131
    %133 = vmatmul.f32.gmra.mxu0 %v61
    %v134 = vpop.f32.mrf.mxu0
    %v135 = vadd.f32 0.0, %v134
    %136 = vmatmul.f32.gmra.mxu0 %v63
    %v137 = vpop.f32.mrf.mxu0
    %v138 = vadd.f32 0.0, %v137
    %139 = vmatmul.f32.gmra.mxu0 %v65
    %v140 = vpop.f32.mrf.mxu0
    %v141 = vadd.f32 0.0, %v140
    %142 = vmatmul.f32.gmra.mxu0 %v67
    %v143 = vpop.f32.mrf.mxu0
    %v144 = vadd.f32 0.0, %v143
    %145 = vmatmul.f32.gmra.mxu0 %v69
    %v146 = vpop.f32.mrf.mxu0
    %v147 = vadd.f32 0.0, %v146
    %148 = vmatmul.f32.gmra.mxu0 %v71
    %v149 = vpop.f32.mrf.mxu0
    %v150 = vadd.f32 0.0, %v149
    %151 = vmatmul.f32.gmra.mxu0 %v73
    %v152 = vpop.f32.mrf.mxu0
    %v153 = vadd.f32 0.0, %v152
    %154 = vmatmul.f32.gmra.mxu0 %v75
    %v155 = vpop.f32.mrf.mxu0
    %v156 = vadd.f32 0.0, %v155
    %157 = vdwg.mxu0
    %158 = vmatpush.xpose.msra.mxu0 %v76
    %159 = vmatpush.xpose.msra.mxu0 %v74
    %160 = vmatpush.xpose.msra.mxu0 %v72
    %161 = vmatpush.xpose.msra.mxu0 %v70
    %162 = vmatpush.xpose.msra.mxu0 %v68
    %163 = vmatpush.xpose.msra.mxu0 %v66
    %164 = vmatpush.xpose.msra.mxu0 %v64
    %165 = vmatpush.xpose.msra.mxu0 %v62
    %166 = vmatpush.xpose.msra.mxu0 %v60
    %167 = vmatpush.xpose.msra.mxu0 %v58
    %168 = vmatpush.xpose.msra.mxu0 %v56
    %169 = vmatpush.xpose.msra.mxu0 %v54
    %170 = vmatpush.xpose.msra.mxu0 %v52
    %171 = vmatpush.xpose.msra.mxu0 %v50
    %172 = vmatpush.xpose.msra.mxu0 %v48
    %173 = vmatpush.xpose.msra.mxu0 %v46
    %174 = vmatmul.f32.gmra.mxu0 %v46
    %v175 = vpop.f32.mrf.mxu0
    %v176 = vadd.f32 %v111, %v175
    %177 = vmatmul.f32.gmra.mxu0 %v48
    %v178 = vpop.f32.mrf.mxu0
    %v179 = vadd.f32 %v114, %v178
    %180 = vmatmul.f32.gmra.mxu0 %v50
    %v181 = vpop.f32.mrf.mxu0
    %v182 = vadd.f32 %v117, %v181
    %183 = vmatmul.f32.gmra.mxu0 %v52
    %v184 = vpop.f32.mrf.mxu0
    %v185 = vadd.f32 %v120, %v184
    %186 = vmatmul.f32.gmra.mxu0 %v54
    %v187 = vpop.f32.mrf.mxu0
    %v188 = vadd.f32 %v123, %v187
    %189 = vmatmul.f32.gmra.mxu0 %v56
    %v190 = vpop.f32.mrf.mxu0
    %v191 = vadd.f32 %v126, %v190
    %192 = vmatmul.f32.gmra.mxu0 %v58
    %v193 = vpop.f32.mrf.mxu0
    %v194 = vadd.f32 %v129, %v193
    %195 = vmatmul.f32.gmra.mxu0 %v60
    %v196 = vpop.f32.mrf.mxu0
    %v197 = vadd.f32 %v132, %v196
    %198 = vmatmul.f32.gmra.mxu0 %v62
    %v199 = vpop.f32.mrf.mxu0
    %v200 = vadd.f32 %v135, %v199
    %201 = vmatmul.f32.gmra.mxu0 %v64
    %v202 = vpop.f32.mrf.mxu0
    %v203 = vadd.f32 %v138, %v202
    %204 = vmatmul.f32.gmra.mxu0 %v66
    %v205 = vpop.f32.mrf.mxu0
    %v206 = vadd.f32 %v141, %v205
    %207 = vmatmul.f32.gmra.mxu0 %v68
    %v208 = vpop.f32.mrf.mxu0
    %v209 = vadd.f32 %v144, %v208
    %210 = vmatmul.f32.gmra.mxu0 %v70
    %v211 = vpop.f32.mrf.mxu0
    %v212 = vadd.f32 %v147, %v211
    %213 = vmatmul.f32.gmra.mxu0 %v72
    %v214 = vpop.f32.mrf.mxu0
    %v215 = vadd.f32 %v150, %v214
    %216 = vmatmul.f32.gmra.mxu0 %v74
    %v217 = vpop.f32.mrf.mxu0
    %v218 = vadd.f32 %v153, %v217
    %219 = vmatmul.f32.gmra.mxu0 %v76
    %v220 = vpop.f32.mrf.mxu0
    %v221 = vadd.f32 %v156, %v220
    %222 = vdwg.mxu0
    %v223 = vadd.f32 %v77, %v176
    %v224 = vadd.f32 %v78, %v179
    %v225 = vadd.f32 %v79, %v182
    %v226 = vadd.f32 %v80, %v185
    %v227 = vadd.f32 %v81, %v188
    %v228 = vadd.f32 %v82, %v191
    %v229 = vadd.f32 %v83, %v194
    %v230 = vadd.f32 %v84, %v197
    %v231 = vadd.f32 %v85, %v200
    %v232 = vadd.f32 %v86, %v203
    %v233 = vadd.f32 %v87, %v206
    %v234 = vadd.f32 %v88, %v209
    %v235 = vadd.f32 %v89, %v212
    %v236 = vadd.f32 %v90, %v215
    %v237 = vadd.f32 %v91, %v218
    %v238 = vadd.f32 %v92, %v221
    %239 = vst [vmem:[#allocation5] sm:$0xff] %v223
    %240 = vst [vmem:[#allocation5 + $0x8] sm:$0xff] %v224
    %241 = vst [vmem:[#allocation5 + $0x10] sm:$0xff] %v225
    %242 = vst [vmem:[#allocation5 + $0x18] sm:$0xff] %v226
    %243 = vst [vmem:[#allocation5 + $0x20] sm:$0xff] %v227
    %244 = vst [vmem:[#allocation5 + $0x28] sm:$0xff] %v228
    %245 = vst [vmem:[#allocation5 + $0x30] sm:$0xff] %v229
    %246 = vst [vmem:[#allocation5 + $0x38] sm:$0xff] %v230
    %247 = vst [vmem:[#allocation5 + $0x40] sm:$0xff] %v231
    %248 = vst [vmem:[#allocation5 + $0x48] sm:$0xff] %v232
    %249 = vst [vmem:[#allocation5 + $0x50] sm:$0xff] %v233
    %250 = vst [vmem:[#allocation5 + $0x58] sm:$0xff] %v234
    %251 = vst [vmem:[#allocation5 + $0x60] sm:$0xff] %v235
    %252 = vst [vmem:[#allocation5 + $0x68] sm:$0xff] %v236
    %253 = vst [vmem:[#allocation5 + $0x70] sm:$0xff] %v237
    %254 = vst [vmem:[#allocation5 + $0x78] sm:$0xff] %v238
    // Predicated region
    $region14: #{tpu_custom_call.1} parent=1 // pred_check
      %p255 = pneg %p25
    $region15: #{tpu_custom_call.1} parent=1 // pred_check_branch
      %257 = sbr.rel (%p255) target = $region17
    $region16: #{tpu_custom_call.1} parent=1 // pred_region
      %v258 = vld [vmem:[#allocation5] sm:$0xff]
      %v259 = vld [vmem:[#allocation5 + $0x8] sm:$0xff]
      %v260 = vld [vmem:[#allocation5 + $0x10] sm:$0xff]
      %v261 = vld [vmem:[#allocation5 + $0x18] sm:$0xff]
      %v262 = vld [vmem:[#allocation5 + $0x20] sm:$0xff]
      %v263 = vld [vmem:[#allocation5 + $0x28] sm:$0xff]
      %v264 = vld [vmem:[#allocation5 + $0x30] sm:$0xff]
      %v265 = vld [vmem:[#allocation5 + $0x38] sm:$0xff]
      %v266 = vld [vmem:[#allocation5 + $0x40] sm:$0xff]
      %v267 = vld [vmem:[#allocation5 + $0x48] sm:$0xff]
      %v268 = vld [vmem:[#allocation5 + $0x50] sm:$0xff]
      %v269 = vld [vmem:[#allocation5 + $0x58] sm:$0xff]
      %v270 = vld [vmem:[#allocation5 + $0x60] sm:$0xff]
      %v271 = vld [vmem:[#allocation5 + $0x68] sm:$0xff]
      %v272 = vld [vmem:[#allocation5 + $0x70] sm:$0xff]
      %v273 = vld [vmem:[#allocation5 + $0x78] sm:$0xff]
      %v274 = vmul.f32 %v258, 0.00048828125
      %v275 = vmul.f32 %v259, 0.00048828125
      %v276 = vmul.f32 %v260, 0.00048828125
      %v277 = vmul.f32 %v261, 0.00048828125
      %v278 = vmul.f32 %v262, 0.00048828125
      %v279 = vmul.f32 %v263, 0.00048828125
      %v280 = vmul.f32 %v264, 0.00048828125
      %v281 = vmul.f32 %v265, 0.00048828125
      %v282 = vmul.f32 %v266, 0.00048828125
      %v283 = vmul.f32 %v267, 0.00048828125
      %v284 = vmul.f32 %v268, 0.00048828125
      %v285 = vmul.f32 %v269, 0.00048828125
      %v286 = vmul.f32 %v270, 0.00048828125
      %v287 = vmul.f32 %v271, 0.00048828125
      %v288 = vmul.f32 %v272, 0.00048828125
      %v289 = vmul.f32 %v273, 0.00048828125
      %290 = vst [vmem:[#allocation5] sm:$0xff] %v274
      %291 = vst [vmem:[#allocation5 + $0x8] sm:$0xff] %v275
      %292 = vst [vmem:[#allocation5 + $0x10] sm:$0xff] %v276
      %293 = vst [vmem:[#allocation5 + $0x18] sm:$0xff] %v277
      %294 = vst [vmem:[#allocation5 + $0x20] sm:$0xff] %v278
      %295 = vst [vmem:[#allocation5 + $0x28] sm:$0xff] %v279
      %296 = vst [vmem:[#allocation5 + $0x30] sm:$0xff] %v280
      %297 = vst [vmem:[#allocation5 + $0x38] sm:$0xff] %v281
      %298 = vst [vmem:[#allocation5 + $0x40] sm:$0xff] %v282
      %299 = vst [vmem:[#allocation5 + $0x48] sm:$0xff] %v283
      %300 = vst [vmem:[#allocation5 + $0x50] sm:$0xff] %v284
      %301 = vst [vmem:[#allocation5 + $0x58] sm:$0xff] %v285
      %302 = vst [vmem:[#allocation5 + $0x60] sm:$0xff] %v286
      %303 = vst [vmem:[#allocation5 + $0x68] sm:$0xff] %v287
      %304 = vst [vmem:[#allocation5 + $0x70] sm:$0xff] %v288
      %305 = vst [vmem:[#allocation5 + $0x78] sm:$0xff] %v289
    $region17: #{tpu_custom_call.1} parent=1 // pred_fallthru
      _
    // Predicated region
    $region18: #{tpu_custom_call.1} parent=1 // pred_check
      _
    $region19: #{tpu_custom_call.1} parent=1 // pred_check_branch
      %307 = sbr.rel (0) target = $region21
    $region20: #{tpu_custom_call.1} parent=1 // pred_region
      %309 = vsyncadd [#allocation4], 0
      %s310 = sshll.u32 [#allocation5], 4
      %s311 = int_to_ptr.vmem [resolvable:$true] %s310
      %s312 = sshll.u32 %s1, 4
      %s313 = int_to_ptr.hbm [resolvable:$true] %s312
      %318 = dma.vmem_to_hbm [thread:$0]  %s311, 2048, %s313, [#allocation4], 128, 128, 8
    $region21: #{tpu_custom_call.1} parent=1 // pred_fallthru
      _
    // Predicated region
    $region22: #{tpu_custom_call.1} parent=1 // pred_check
      _
    $region23: #{tpu_custom_call.1} parent=1 // pred_check_branch
      %320 = sbr.rel (0) target = $region25
    $region24: #{tpu_custom_call.1} parent=1 // pred_region
      %322 = dma.done [#allocation4], 2048
    $region25: #{tpu_custom_call.1} parent=1 // pred_fallthru
      _
    %323 = vsyncpa [#allocation3], 1
    %324 = vsyncpa [#allocation4], 1

</llo_original>
